<compile_context>
chip_gen: v5e
topology: v5e:2x2
jax: 0.10.0
libtpu: 0.0.40
codegen_flags: <defaults>
</compile_context>

<pallas_src>
import functools

import jax
import jax.numpy as jnp
from jax import lax
from jax.experimental import pallas as pl
from jax.experimental.pallas import tpu as pltpu


def mha_kernel(x_ref, wqkv_ref, wp_ref, bp_ref, o_ref, attn_ref, *, B, T, H, hs):
    # x_ref: (B*T, C)   wqkv_ref: (C, 3*H*hs)   wp_ref: (H*hs, C)   bp_ref: (1, C)
    # o_ref: (B*T, C)   attn_ref (VMEM scratch): (B*T, H*hs)
    x = x_ref[...].astype(jnp.float32)                      # (BT, C)
    C = x.shape[1]
    scale = jnp.float32(C ** -0.5)                          # module scales by n_embed**-0.5

    # Fused QKV projection: one MXU matmul instead of 3*H tiny ones.
    qkv = jnp.dot(x, wqkv_ref[...], preferred_element_type=jnp.float32)  # (BT, 3*H*hs)
    HHS = H * hs
    q_all = qkv[:, 0:HHS]                                   # (BT, H*hs)
    k_all = qkv[:, HHS:2 * HHS]
    v_all = qkv[:, 2 * HHS:3 * HHS]

    # Causal mask built in-kernel, hoisted out of the head loop.
    row = lax.broadcasted_iota(jnp.int32, (B, T, T), 1)
    col = lax.broadcasted_iota(jnp.int32, (B, T, T), 2)
    causal = row >= col
    neg_big = jnp.float32(-1e30)

    for h in range(H):                                      # static unroll, H small
        lo, hi = h * hs, (h + 1) * hs
        q = q_all[:, lo:hi].reshape(B, T, hs)
        k = k_all[:, lo:hi].reshape(B, T, hs)
        v = v_all[:, lo:hi].reshape(B, T, hs)

        # Batched over B, contracting head dim (no transpose of k).
        s = jnp.einsum('btd,bsd->bts', q, k,
                       preferred_element_type=jnp.float32) * scale       # (B, T, T)
        s = jnp.where(causal, s, neg_big)
        m = jnp.max(s, axis=-1, keepdims=True)
        p = jnp.exp(s - m)
        denom = jnp.sum(p, axis=-1, keepdims=True)                       # (B, T, 1)
        o_h = jnp.einsum('bts,bsd->btd', p, v,
                         preferred_element_type=jnp.float32)             # (B, T, hs)
        o_h = o_h * pl.reciprocal(denom, approx=True)                    # divide on EUP

        # Write head output into its lane slice of the scratch (no concatenate).
        attn_ref[:, lo:hi] = o_h.reshape(B * T, hs)

    # Single fused output projection + bias, one lane-dense store of all rows.
    proj = jnp.dot(attn_ref[...], wp_ref[...],
                   preferred_element_type=jnp.float32) + bp_ref[...]
    o_ref[...] = proj.astype(o_ref.dtype)


def multihead_attention(x, wq, wk, wv, w_proj, b_proj):
    B, T, C = x.shape
    H, _, hs = wq.shape

    def flat(w):                                            # (H, C, hs) -> (C, H*hs)
        return jnp.transpose(w, (1, 0, 2)).reshape(C, H * hs)

    # Layout plumbing outside the kernel: fused, lane-dense QKV weight.
    w_qkv = jnp.concatenate([flat(wq), flat(wk), flat(wv)], axis=1)      # (C, 3*H*hs)
    x2d = x.reshape(B * T, C)
    b2d = b_proj.reshape(1, C)

    kernel = functools.partial(mha_kernel, B=B, T=T, H=H, hs=hs)
    out2d = pl.pallas_call(
        kernel,
        out_shape=jax.ShapeDtypeStruct((B * T, C), x.dtype),
        scratch_shapes=[pltpu.VMEM((B * T, H * hs), jnp.float32)],
    )(x2d, w_qkv, w_proj, b2d)
    return out2d.reshape(B, T, C)


def reference(x, wq, wk, wv, w_proj, b_proj):
    B, T, C = x.shape
    H = wq.shape[0]
    scale = C ** (-0.5)
    tril = jnp.tril(jnp.ones((T, T), dtype=jnp.float32))
    outs = []
    for h in range(H):
        q = x @ wq[h]
        k = x @ wk[h]
        v = x @ wv[h]
        w = (q @ jnp.swapaxes(k, -2, -1)) * scale
        w = jnp.where(tril == 0.0, -jnp.inf, w)
        w = jax.nn.softmax(w, axis=-1)
        outs.append(w @ v)
    out = jnp.concatenate(outs, axis=-1)
    return out @ w_proj + b_proj


if __name__ == "__main__":
    # Shapes consistent with the module defaults:
    # n_embed=32, block_size=8 -> T=8, num_heads=4, head_size=8, batch=2
    B, T, C = 2, 8, 32
    H, hs = 4, 8

    key = jax.random.PRNGKey(0)
    kx, kq, kk, kv, kp, kb = jax.random.split(key, 6)

    x = jax.random.normal(kx, (B, T, C), dtype=jnp.float32)
    # Deterministic synthetic parameters (Linear weights in (in, out) layout).
    wq = jax.random.normal(kq, (H, C, hs), dtype=jnp.float32) * 0.1
    wk = jax.random.normal(kk, (H, C, hs), dtype=jnp.float32) * 0.1
    wv = jax.random.normal(kv, (H, C, hs), dtype=jnp.float32) * 0.1
    w_proj = jax.random.normal(kp, (H * hs, C), dtype=jnp.float32) * 0.1
    b_proj = jax.random.normal(kb, (C,), dtype=jnp.float32) * 0.1

    out = multihead_attention(x, wq, wk, wv, w_proj, b_proj)
    out = jax.block_until_ready(out)

    ref = reference(x, wq, wk, wv, w_proj, b_proj)
    assert out.shape == (B, T, C)
    # approx reciprocal (EUP) has ~1e-4 relative error; tolerance reflects that.
    assert jnp.allclose(out, ref, atol=1e-3, rtol=1e-3), "mismatch vs reference"

    print("KERNEL_OK")
</pallas_src>

<mosaic_0001>
module attributes {stable_mosaic.version = 11 : i64} {
  func.func @mha_kernel(%arg0: memref<16x32xf32, #tpu.memory_space<vmem>>, %arg1: memref<32x96xf32, #tpu.memory_space<vmem>>, %arg2: memref<32x32xf32, #tpu.memory_space<vmem>>, %arg3: memref<1x32xf32, #tpu.memory_space<vmem>>, %arg4: memref<16x32xf32, #tpu.memory_space<vmem>>, %arg5: memref<16x32xf32, #tpu.memory_space<vmem>>) attributes {dimension_semantics = [], scalar_prefetch = 0 : i64, scratch_operands = 1 : i64, tpu.core_type = #tpu.core_type<tc>} {
    %c0 = arith.constant 0 : index
    %c0_0 = arith.constant 0 : index
    %0 = vector.load %arg0[%c0, %c0_0] : memref<16x32xf32, #tpu.memory_space<vmem>>, vector<16x32xf32>
    %c0_1 = arith.constant 0 : index
    %c0_2 = arith.constant 0 : index
    %1 = vector.load %arg1[%c0_1, %c0_2] : memref<32x96xf32, #tpu.memory_space<vmem>>, vector<32x96xf32>
    %cst = arith.constant dense<0.000000e+00> : vector<16x96xf32>
    %2 = tpu.matmul %0, %1, %cst {dimension_numbers = #tpu.dot_dimension_numbers<[1], [0], [0], [1], [0, 0, 1, 1], [], []>} : vector<16x32xf32>, vector<32x96xf32>, vector<16x96xf32> -> vector<16x96xf32>
    %3 = vector.extract_strided_slice %2 {offsets = [0, 0], sizes = [16, 32], strides = [1, 1]} : vector<16x96xf32> to vector<16x32xf32>
    %4 = vector.extract_strided_slice %2 {offsets = [0, 32], sizes = [16, 32], strides = [1, 1]} : vector<16x96xf32> to vector<16x32xf32>
    %5 = vector.extract_strided_slice %2 {offsets = [0, 64], sizes = [16, 32], strides = [1, 1]} : vector<16x96xf32> to vector<16x32xf32>
    %6 = tpu.iota {dimensions = array<i32: 1>} : vector<2x8x8xi32>
    %7 = tpu.iota {dimensions = array<i32: 2>} : vector<2x8x8xi32>
    %8 = arith.cmpi sge, %6, %7 : vector<2x8x8xi32>
    %9 = vector.extract_strided_slice %3 {offsets = [0, 0], sizes = [16, 8], strides = [1, 1]} : vector<16x32xf32> to vector<16x8xf32>
    %10 = vector.shape_cast %9 : vector<16x8xf32> to vector<2x8x8xf32>
    %11 = vector.extract_strided_slice %4 {offsets = [0, 0], sizes = [16, 8], strides = [1, 1]} : vector<16x32xf32> to vector<16x8xf32>
    %12 = vector.shape_cast %11 : vector<16x8xf32> to vector<2x8x8xf32>
    %13 = vector.extract_strided_slice %5 {offsets = [0, 0], sizes = [16, 8], strides = [1, 1]} : vector<16x32xf32> to vector<16x8xf32>
    %14 = vector.shape_cast %13 : vector<16x8xf32> to vector<2x8x8xf32>
    "tpu.trace_start"() <{level = 10 : i32, message = "btd,bsd->bts"}> : () -> ()
    %cst_3 = arith.constant dense<0.000000e+00> : vector<2x8x8xf32>
    %15 = tpu.matmul %10, %12, %cst_3 {dimension_numbers = #tpu.dot_dimension_numbers<[2], [2], [1], [1], [0, 0, 0, 1, 1, 1], [0], [0]>} : vector<2x8x8xf32>, vector<2x8x8xf32>, vector<2x8x8xf32> -> vector<2x8x8xf32>
    "tpu.trace_stop"() : () -> ()
    %cst_4 = arith.constant 0.176776692 : f32
    %16 = vector.broadcast %cst_4 : f32 to vector<2x8x8xf32>
    %17 = arith.mulf %15, %16 : vector<2x8x8xf32>
    %cst_5 = arith.constant -1.000000e+30 : f32
    %18 = vector.broadcast %cst_5 : f32 to vector<2x8x8xf32>
    %19 = arith.select %8, %17, %18 : vector<2x8x8xi1>, vector<2x8x8xf32>
    %cst_6 = arith.constant dense<0xFF800000> : vector<2x8xf32>
    %20 = vector.multi_reduction <maximumf>, %19, %cst_6 [2] : vector<2x8x8xf32> to vector<2x8xf32>
    %21 = vector.shape_cast %20 : vector<2x8xf32> to vector<2x8x1xf32>
    %22 = vector.broadcast %21 : vector<2x8x1xf32> to vector<2x8x8xf32>
    %23 = arith.subf %19, %22 : vector<2x8x8xf32>
    %24 = math.exp %23 : vector<2x8x8xf32>
    %cst_7 = arith.constant dense<0.000000e+00> : vector<2x8xf32>
    %25 = vector.multi_reduction <add>, %24, %cst_7 [2] : vector<2x8x8xf32> to vector<2x8xf32>
    %26 = vector.shape_cast %25 : vector<2x8xf32> to vector<2x8x1xf32>
    "tpu.trace_start"() <{level = 10 : i32, message = "bts,bsd->btd"}> : () -> ()
    %cst_8 = arith.constant dense<0.000000e+00> : vector<2x8x8xf32>
    %27 = tpu.matmul %24, %14, %cst_8 {dimension_numbers = #tpu.dot_dimension_numbers<[2], [1], [1], [2], [0, 0, 0, 1, 1, 2], [0], [0]>} : vector<2x8x8xf32>, vector<2x8x8xf32>, vector<2x8x8xf32> -> vector<2x8x8xf32>
    "tpu.trace_stop"() : () -> ()
    %28 = tpu.reciprocal %26 {approx = true} : vector<2x8x1xf32> -> vector<2x8x1xf32>
    %29 = vector.broadcast %28 : vector<2x8x1xf32> to vector<2x8x8xf32>
    %30 = arith.mulf %27, %29 : vector<2x8x8xf32>
    %31 = vector.shape_cast %30 : vector<2x8x8xf32> to vector<16x8xf32>
    %c0_9 = arith.constant 0 : index
    %c0_10 = arith.constant 0 : index
    %32 = vector.load %arg5[%c0_9, %c0_10] : memref<16x32xf32, #tpu.memory_space<vmem>>, vector<16x8xf32>
    tpu.vector_store %arg5[%c0_9, %c0_10], %31 {strides = array<i32>} : memref<16x32xf32, #tpu.memory_space<vmem>>, vector<16x8xf32>,
    %33 = vector.extract_strided_slice %3 {offsets = [0, 8], sizes = [16, 8], strides = [1, 1]} : vector<16x32xf32> to vector<16x8xf32>
    %34 = vector.shape_cast %33 : vector<16x8xf32> to vector<2x8x8xf32>
    %35 = vector.extract_strided_slice %4 {offsets = [0, 8], sizes = [16, 8], strides = [1, 1]} : vector<16x32xf32> to vector<16x8xf32>
    %36 = vector.shape_cast %35 : vector<16x8xf32> to vector<2x8x8xf32>
    %37 = vector.extract_strided_slice %5 {offsets = [0, 8], sizes = [16, 8], strides = [1, 1]} : vector<16x32xf32> to vector<16x8xf32>
    %38 = vector.shape_cast %37 : vector<16x8xf32> to vector<2x8x8xf32>
    "tpu.trace_start"() <{level = 10 : i32, message = "btd,bsd->bts"}> : () -> ()
    %cst_11 = arith.constant dense<0.000000e+00> : vector<2x8x8xf32>
    %39 = tpu.matmul %34, %36, %cst_11 {dimension_numbers = #tpu.dot_dimension_numbers<[2], [2], [1], [1], [0, 0, 0, 1, 1, 1], [0], [0]>} : vector<2x8x8xf32>, vector<2x8x8xf32>, vector<2x8x8xf32> -> vector<2x8x8xf32>
    "tpu.trace_stop"() : () -> ()
    %cst_12 = arith.constant 0.176776692 : f32
    %40 = vector.broadcast %cst_12 : f32 to vector<2x8x8xf32>
    %41 = arith.mulf %39, %40 : vector<2x8x8xf32>
    %cst_13 = arith.constant -1.000000e+30 : f32
    %42 = vector.broadcast %cst_13 : f32 to vector<2x8x8xf32>
    %43 = arith.select %8, %41, %42 : vector<2x8x8xi1>, vector<2x8x8xf32>
    %cst_14 = arith.constant dense<0xFF800000> : vector<2x8xf32>
    %44 = vector.multi_reduction <maximumf>, %43, %cst_14 [2] : vector<2x8x8xf32> to vector<2x8xf32>
    %45 = vector.shape_cast %44 : vector<2x8xf32> to vector<2x8x1xf32>
    %46 = vector.broadcast %45 : vector<2x8x1xf32> to vector<2x8x8xf32>
    %47 = arith.subf %43, %46 : vector<2x8x8xf32>
    %48 = math.exp %47 : vector<2x8x8xf32>
    %cst_15 = arith.constant dense<0.000000e+00> : vector<2x8xf32>
    %49 = vector.multi_reduction <add>, %48, %cst_15 [2] : vector<2x8x8xf32> to vector<2x8xf32>
    %50 = vector.shape_cast %49 : vector<2x8xf32> to vector<2x8x1xf32>
    "tpu.trace_start"() <{level = 10 : i32, message = "bts,bsd->btd"}> : () -> ()
    %cst_16 = arith.constant dense<0.000000e+00> : vector<2x8x8xf32>
    %51 = tpu.matmul %48, %38, %cst_16 {dimension_numbers = #tpu.dot_dimension_numbers<[2], [1], [1], [2], [0, 0, 0, 1, 1, 2], [0], [0]>} : vector<2x8x8xf32>, vector<2x8x8xf32>, vector<2x8x8xf32> -> vector<2x8x8xf32>
    "tpu.trace_stop"() : () -> ()
    %52 = tpu.reciprocal %50 {approx = true} : vector<2x8x1xf32> -> vector<2x8x1xf32>
    %53 = vector.broadcast %52 : vector<2x8x1xf32> to vector<2x8x8xf32>
    %54 = arith.mulf %51, %53 : vector<2x8x8xf32>
    %55 = vector.shape_cast %54 : vector<2x8x8xf32> to vector<16x8xf32>
    %c0_17 = arith.constant 0 : index
    %c8 = arith.constant 8 : index
    %56 = vector.load %arg5[%c0_17, %c8] : memref<16x32xf32, #tpu.memory_space<vmem>>, vector<16x8xf32>
    tpu.vector_store %arg5[%c0_17, %c8], %55 {strides = array<i32>} : memref<16x32xf32, #tpu.memory_space<vmem>>, vector<16x8xf32>,
    %57 = vector.extract_strided_slice %3 {offsets = [0, 16], sizes = [16, 8], strides = [1, 1]} : vector<16x32xf32> to vector<16x8xf32>
    %58 = vector.shape_cast %57 : vector<16x8xf32> to vector<2x8x8xf32>
    %59 = vector.extract_strided_slice %4 {offsets = [0, 16], sizes = [16, 8], strides = [1, 1]} : vector<16x32xf32> to vector<16x8xf32>
    %60 = vector.shape_cast %59 : vector<16x8xf32> to vector<2x8x8xf32>
    %61 = vector.extract_strided_slice %5 {offsets = [0, 16], sizes = [16, 8], strides = [1, 1]} : vector<16x32xf32> to vector<16x8xf32>
    %62 = vector.shape_cast %61 : vector<16x8xf32> to vector<2x8x8xf32>
    "tpu.trace_start"() <{level = 10 : i32, message = "btd,bsd->bts"}> : () -> ()
    %cst_18 = arith.constant dense<0.000000e+00> : vector<2x8x8xf32>
    %63 = tpu.matmul %58, %60, %cst_18 {dimension_numbers = #tpu.dot_dimension_numbers<[2], [2], [1], [1], [0, 0, 0, 1, 1, 1], [0], [0]>} : vector<2x8x8xf32>, vector<2x8x8xf32>, vector<2x8x8xf32> -> vector<2x8x8xf32>
    "tpu.trace_stop"() : () -> ()
    %cst_19 = arith.constant 0.176776692 : f32
    %64 = vector.broadcast %cst_19 : f32 to vector<2x8x8xf32>
    %65 = arith.mulf %63, %64 : vector<2x8x8xf32>
    %cst_20 = arith.constant -1.000000e+30 : f32
    %66 = vector.broadcast %cst_20 : f32 to vector<2x8x8xf32>
    %67 = arith.select %8, %65, %66 : vector<2x8x8xi1>, vector<2x8x8xf32>
    %cst_21 = arith.constant dense<0xFF800000> : vector<2x8xf32>
    %68 = vector.multi_reduction <maximumf>, %67, %cst_21 [2] : vector<2x8x8xf32> to vector<2x8xf32>
    %69 = vector.shape_cast %68 : vector<2x8xf32> to vector<2x8x1xf32>
    %70 = vector.broadcast %69 : vector<2x8x1xf32> to vector<2x8x8xf32>
    %71 = arith.subf %67, %70 : vector<2x8x8xf32>
    %72 = math.exp %71 : vector<2x8x8xf32>
    %cst_22 = arith.constant dense<0.000000e+00> : vector<2x8xf32>
    %73 = vector.multi_reduction <add>, %72, %cst_22 [2] : vector<2x8x8xf32> to vector<2x8xf32>
    %74 = vector.shape_cast %73 : vector<2x8xf32> to vector<2x8x1xf32>
    "tpu.trace_start"() <{level = 10 : i32, message = "bts,bsd->btd"}> : () -> ()
    %cst_23 = arith.constant dense<0.000000e+00> : vector<2x8x8xf32>
    %75 = tpu.matmul %72, %62, %cst_23 {dimension_numbers = #tpu.dot_dimension_numbers<[2], [1], [1], [2], [0, 0, 0, 1, 1, 2], [0], [0]>} : vector<2x8x8xf32>, vector<2x8x8xf32>, vector<2x8x8xf32> -> vector<2x8x8xf32>
    "tpu.trace_stop"() : () -> ()
    %76 = tpu.reciprocal %74 {approx = true} : vector<2x8x1xf32> -> vector<2x8x1xf32>
    %77 = vector.broadcast %76 : vector<2x8x1xf32> to vector<2x8x8xf32>
    %78 = arith.mulf %75, %77 : vector<2x8x8xf32>
    %79 = vector.shape_cast %78 : vector<2x8x8xf32> to vector<16x8xf32>
    %c0_24 = arith.constant 0 : index
    %c16 = arith.constant 16 : index
    %80 = vector.load %arg5[%c0_24, %c16] : memref<16x32xf32, #tpu.memory_space<vmem>>, vector<16x8xf32>
    tpu.vector_store %arg5[%c0_24, %c16], %79 {strides = array<i32>} : memref<16x32xf32, #tpu.memory_space<vmem>>, vector<16x8xf32>,
    %81 = vector.extract_strided_slice %3 {offsets = [0, 24], sizes = [16, 8], strides = [1, 1]} : vector<16x32xf32> to vector<16x8xf32>
    %82 = vector.shape_cast %81 : vector<16x8xf32> to vector<2x8x8xf32>
    %83 = vector.extract_strided_slice %4 {offsets = [0, 24], sizes = [16, 8], strides = [1, 1]} : vector<16x32xf32> to vector<16x8xf32>
    %84 = vector.shape_cast %83 : vector<16x8xf32> to vector<2x8x8xf32>
    %85 = vector.extract_strided_slice %5 {offsets = [0, 24], sizes = [16, 8], strides = [1, 1]} : vector<16x32xf32> to vector<16x8xf32>
    %86 = vector.shape_cast %85 : vector<16x8xf32> to vector<2x8x8xf32>
    "tpu.trace_start"() <{level = 10 : i32, message = "btd,bsd->bts"}> : () -> ()
    %cst_25 = arith.constant dense<0.000000e+00> : vector<2x8x8xf32>
    %87 = tpu.matmul %82, %84, %cst_25 {dimension_numbers = #tpu.dot_dimension_numbers<[2], [2], [1], [1], [0, 0, 0, 1, 1, 1], [0], [0]>} : vector<2x8x8xf32>, vector<2x8x8xf32>, vector<2x8x8xf32> -> vector<2x8x8xf32>
    "tpu.trace_stop"() : () -> ()
    %cst_26 = arith.constant 0.176776692 : f32
    %88 = vector.broadcast %cst_26 : f32 to vector<2x8x8xf32>
    %89 = arith.mulf %87, %88 : vector<2x8x8xf32>
    %cst_27 = arith.constant -1.000000e+30 : f32
    %90 = vector.broadcast %cst_27 : f32 to vector<2x8x8xf32>
    %91 = arith.select %8, %89, %90 : vector<2x8x8xi1>, vector<2x8x8xf32>
    %cst_28 = arith.constant dense<0xFF800000> : vector<2x8xf32>
    %92 = vector.multi_reduction <maximumf>, %91, %cst_28 [2] : vector<2x8x8xf32> to vector<2x8xf32>
    %93 = vector.shape_cast %92 : vector<2x8xf32> to vector<2x8x1xf32>
    %94 = vector.broadcast %93 : vector<2x8x1xf32> to vector<2x8x8xf32>
    %95 = arith.subf %91, %94 : vector<2x8x8xf32>
    %96 = math.exp %95 : vector<2x8x8xf32>
    %cst_29 = arith.constant dense<0.000000e+00> : vector<2x8xf32>
    %97 = vector.multi_reduction <add>, %96, %cst_29 [2] : vector<2x8x8xf32> to vector<2x8xf32>
    %98 = vector.shape_cast %97 : vector<2x8xf32> to vector<2x8x1xf32>
    "tpu.trace_start"() <{level = 10 : i32, message = "bts,bsd->btd"}> : () -> ()
    %cst_30 = arith.constant dense<0.000000e+00> : vector<2x8x8xf32>
    %99 = tpu.matmul %96, %86, %cst_30 {dimension_numbers = #tpu.dot_dimension_numbers<[2], [1], [1], [2], [0, 0, 0, 1, 1, 2], [0], [0]>} : vector<2x8x8xf32>, vector<2x8x8xf32>, vector<2x8x8xf32> -> vector<2x8x8xf32>
    "tpu.trace_stop"() : () -> ()
    %100 = tpu.reciprocal %98 {approx = true} : vector<2x8x1xf32> -> vector<2x8x1xf32>
    %101 = vector.broadcast %100 : vector<2x8x1xf32> to vector<2x8x8xf32>
    %102 = arith.mulf %99, %101 : vector<2x8x8xf32>
    %103 = vector.shape_cast %102 : vector<2x8x8xf32> to vector<16x8xf32>
    %c0_31 = arith.constant 0 : index
    %c24 = arith.constant 24 : index
    %104 = vector.load %arg5[%c0_31, %c24] : memref<16x32xf32, #tpu.memory_space<vmem>>, vector<16x8xf32>
    tpu.vector_store %arg5[%c0_31, %c24], %103 {strides = array<i32>} : memref<16x32xf32, #tpu.memory_space<vmem>>, vector<16x8xf32>,
    %c0_32 = arith.constant 0 : index
    %c0_33 = arith.constant 0 : index
    %105 = vector.load %arg5[%c0_32, %c0_33] : memref<16x32xf32, #tpu.memory_space<vmem>>, vector<16x32xf32>
    %c0_34 = arith.constant 0 : index
    %c0_35 = arith.constant 0 : index
    %106 = vector.load %arg2[%c0_34, %c0_35] : memref<32x32xf32, #tpu.memory_space<vmem>>, vector<32x32xf32>
    %cst_36 = arith.constant dense<0.000000e+00> : vector<16x32xf32>
    %107 = tpu.matmul %105, %106, %cst_36 {dimension_numbers = #tpu.dot_dimension_numbers<[1], [0], [0], [1], [0, 0, 1, 1], [], []>} : vector<16x32xf32>, vector<32x32xf32>, vector<16x32xf32> -> vector<16x32xf32>
    %c0_37 = arith.constant 0 : index
    %c0_38 = arith.constant 0 : index
    %108 = vector.load %arg3[%c0_37, %c0_38] : memref<1x32xf32, #tpu.memory_space<vmem>>, vector<1x32xf32>
    %109 = vector.broadcast %108 : vector<1x32xf32> to vector<16x32xf32>
    %110 = arith.addf %107, %109 : vector<16x32xf32>
    %c0_39 = arith.constant 0 : index
    %c0_40 = arith.constant 0 : index
    %111 = vector.load %arg4[%c0_39, %c0_40] : memref<16x32xf32, #tpu.memory_space<vmem>>, vector<16x32xf32>
    tpu.vector_store %arg4[%c0_39, %c0_40], %110 {strides = array<i32>} : memref<16x32xf32, #tpu.memory_space<vmem>>, vector<16x32xf32>,
    return
  }
}

</mosaic_0001>

<llo_original>
// kernel: tpu_custom_call.1
$region0: #{tpu_custom_call.1}
  #allocation0 [shape = 'u32[]', space=smem, size = 0x4, offset = 0x4, fixed_abs, tag = 'smem constant byte address 0x4 - core index']
  #allocation1 [shape = 'u32[72,128]{1,0:T(1,128)}', space=vmem, size = 0x9000, scoped, tag = 'internal scratch']
  #allocation2 [shape = 'f32[16,32]{1,0:T(8,128)}', space=vmem, size = 0x2000, scoped, tag = 'scratch operand']
  %s0 = inlined_call_operand.hbm [shape: f32[16,32], index: 0, kind: input, shape index: {}]
  %s1 = inlined_call_operand.hbm [shape: f32[32,96], index: 1, kind: input, shape index: {}]
  %s2 = inlined_call_operand.hbm [shape: f32[32,32], index: 2, kind: input, shape index: {}]
  %s3 = inlined_call_operand.vmem [shape: f32[1,32], index: 3, kind: input, shape index: {}]
  %s4 = inlined_call_operand.hbm [shape: f32[16,32], index: 4, kind: output, shape index: {}]
  %s5 = sld [smem:[#allocation0]]
  $region38: #{tpu_custom_call.1} parent=0
    _
  %s7 = ssub.s32 1, %s5
  %s8 = scalar_select 0, %s7, %s5
  $region1: #{tpu_custom_call.1} parent=0
    #allocation3 [shape = 'u8[8192]{0}', space=vmem, size = 0x2000, scoped, tag = 'input window, operand 0, single buffered']
    #allocation4 [shape = 's32[1]{0}', space=sflag, size = 0x4, scoped, tag = 'scoped memory for tpu_custom_call.1']
    #allocation5 [shape = 's32[1]{0}', space=sflag, size = 0x4, scoped, tag = 'scoped memory for tpu_custom_call.1']
    #allocation6 [shape = 'u8[16384]{0}', space=vmem, size = 0x4000, scoped, tag = 'input window, operand 1, single buffered']
    #allocation7 [shape = 's32[1]{0}', space=sflag, size = 0x4, scoped, tag = 'scoped memory for tpu_custom_call.1']
    #allocation8 [shape = 'u8[16384]{0}', space=vmem, size = 0x4000, scoped, tag = 'input window, operand 2, single buffered']
    #allocation9 [shape = 'u8[8192]{0}', space=vmem, size = 0x2000, scoped, tag = 'output window, operand 0, single buffered']
    %9 = vsyncpa [#allocation4], 0
    %10 = vsyncpa [#allocation7], 0
    %11 = vsyncpa [#allocation5], 0
    // Predicated region
    $region2: #{tpu_custom_call.1} parent=1 // pred_check
      _
    $region3: #{tpu_custom_call.1} parent=1 // pred_check_branch
      %13 = sbr.rel (0) target = $region5
    $region4: #{tpu_custom_call.1} parent=1 // pred_region
      %15 = vsyncadd [#allocation4], 0
      %s16 = sshll.u32 %s0, 4
      %s17 = int_to_ptr.hbm [resolvable:$true] %s16
      %s18 = sshll.u32 [#allocation3], 4
      %s19 = int_to_ptr.vmem [resolvable:$true] %s18
      %24 = dma.hbm_to_vmem [thread:$0]  %s17, 256, %s19, [#allocation4], 128, 128, 8
    $region5: #{tpu_custom_call.1} parent=1 // pred_fallthru
      _
    // Predicated region
    $region6: #{tpu_custom_call.1} parent=1 // pred_check
      _
    $region7: #{tpu_custom_call.1} parent=1 // pred_check_branch
      %26 = sbr.rel (0) target = $region9
    $region8: #{tpu_custom_call.1} parent=1 // pred_region
      %28 = vsyncadd [#allocation7], 0
      %s29 = sshll.u32 %s1, 4
      %s30 = int_to_ptr.hbm [resolvable:$true] %s29
      %s31 = sshll.u32 [#allocation6], 4
      %s32 = int_to_ptr.vmem [resolvable:$true] %s31
      %37 = dma.hbm_to_vmem [thread:$0]  %s30, 512, %s32, [#allocation7], 128, 128, 8
    $region9: #{tpu_custom_call.1} parent=1 // pred_fallthru
      _
    // Predicated region
    $region10: #{tpu_custom_call.1} parent=1 // pred_check
      _
    $region11: #{tpu_custom_call.1} parent=1 // pred_check_branch
      %39 = sbr.rel (0) target = $region13
    $region12: #{tpu_custom_call.1} parent=1 // pred_region
      %41 = vsyncadd [#allocation7], 0
      %s42 = sshll.u32 %s2, 4
      %s43 = int_to_ptr.hbm [resolvable:$true] %s42
      %s44 = sshll.u32 [#allocation8], 4
      %s45 = int_to_ptr.vmem [resolvable:$true] %s44
      %50 = dma.hbm_to_vmem [thread:$0]  %s43, 512, %s45, [#allocation7], 128, 128, 8
    $region13: #{tpu_custom_call.1} parent=1 // pred_fallthru
      _
    // Predicated region
    $region14: #{tpu_custom_call.1} parent=1 // pred_check
      _
    $region15: #{tpu_custom_call.1} parent=1 // pred_check_branch
      %52 = sbr.rel (0) target = $region17
    $region16: #{tpu_custom_call.1} parent=1 // pred_region
      _
    $region17: #{tpu_custom_call.1} parent=1 // pred_fallthru
      _
    // Predicated region
    $region18: #{tpu_custom_call.1} parent=1 // pred_check
      _
    $region19: #{tpu_custom_call.1} parent=1 // pred_check_branch
      %54 = sbr.rel (0) target = $region21
    $region20: #{tpu_custom_call.1} parent=1 // pred_region
      %56 = dma.done [#allocation4], 256
    $region21: #{tpu_custom_call.1} parent=1 // pred_fallthru
      _
    // Predicated region
    $region22: #{tpu_custom_call.1} parent=1 // pred_check
      _
    $region23: #{tpu_custom_call.1} parent=1 // pred_check_branch
      %58 = sbr.rel (0) target = $region25
    $region24: #{tpu_custom_call.1} parent=1 // pred_region
      %60 = dma.done [#allocation7], 512
    $region25: #{tpu_custom_call.1} parent=1 // pred_fallthru
      _
    // Predicated region
    $region26: #{tpu_custom_call.1} parent=1 // pred_check
      _
    $region27: #{tpu_custom_call.1} parent=1 // pred_check_branch
      %62 = sbr.rel (0) target = $region29
    $region28: #{tpu_custom_call.1} parent=1 // pred_region
      %64 = dma.done [#allocation7], 512
    $region29: #{tpu_custom_call.1} parent=1 // pred_fallthru
      _
    %v65 = vld [vmem:[#allocation3] sm:$0xff]
    %v66 = vld [vmem:[#allocation3 + $0x8] sm:$0xff]
    %v67 = vld [vmem:[#allocation6] sm:$0xff]
    %v68 = vld [vmem:[#allocation6 + $0x8] sm:$0xff]
    %v69 = vld [vmem:[#allocation6 + $0x10] sm:$0xff]
    %v70 = vld [vmem:[#allocation6 + $0x18] sm:$0xff]
    %vm71 = vcmask 261120
    %v73 = vsel %vm71, %v65, 0
    %v76 = vsel %vm71, %v66, 0
    %78 = vmatpush.msra.mxu0 0.0
    %79 = vmatpush.msra.mxu0 0.0
    %80 = vmatpush.msra.mxu0 0.0
    %81 = vmatpush.msra.mxu0 0.0
    %82 = vmatpush.msra.mxu0 0.0
    %83 = vmatpush.msra.mxu0 0.0
    %84 = vmatpush.msra.mxu0 0.0
    %85 = vmatpush.msra.mxu0 0.0
    %86 = vmatpush.msra.mxu0 0.0
    %87 = vmatpush.msra.mxu0 0.0
    %88 = vmatpush.msra.mxu0 0.0
    %89 = vmatpush.msra.mxu0 0.0
    %90 = vmatpush.msra.mxu0 %v70
    %91 = vmatpush.msra.mxu0 %v69
    %92 = vmatpush.msra.mxu0 %v68
    %93 = vmatpush.msra.mxu0 %v67
    %94 = vmatmul.f32.gmra.mxu0 %v73
    %v95 = vpop.f32.mrf.mxu0
    %v96 = vadd.f32 0.0, %v95
    %97 = vmatmul.f32.gmra.mxu0 %v76
    %v98 = vpop.f32.mrf.mxu0
    %v99 = vadd.f32 0.0, %v98
    %100 = vdwg.mxu0
    %v101 = vlaneseq
    %v102 = vshrl.u32 %v101, 7
    %v103 = vlaneseq
    %v104 = vand.u32 %v103, 127
    %vm105 = vcmp.ge.s32.totalorder %v102, %v104
    %107 = vrot.lane.b32.xlu0 %v96, 96
    %v108 = vpop.permute.xlu0 %107
    %vm109 = vcmask 64512
    %v110 = vsel %vm109, %v96, 0
    %v112 = vsel %vm109, %v108, 0
    %114 = vmatpush.xpose.msra.mxu0 0.0
    %115 = vmatpush.xpose.msra.mxu0 0.0
    %116 = vmatpush.xpose.msra.mxu0 0.0
    %117 = vmatpush.xpose.msra.mxu0 0.0
    %118 = vmatpush.xpose.msra.mxu0 0.0
    %119 = vmatpush.xpose.msra.mxu0 0.0
    %120 = vmatpush.xpose.msra.mxu0 0.0
    %121 = vmatpush.xpose.msra.mxu0 0.0
    %122 = vmatpush.xpose.msra.mxu0 0.0
    %123 = vmatpush.xpose.msra.mxu0 0.0
    %124 = vmatpush.xpose.msra.mxu0 0.0
    %125 = vmatpush.xpose.msra.mxu0 0.0
    %126 = vmatpush.xpose.msra.mxu0 0.0
    %127 = vmatpush.xpose.msra.mxu0 0.0
    %128 = vmatpush.xpose.msra.mxu0 0.0
    %129 = vmatpush.xpose.msra.mxu0 %v112
    %130 = vmatmul.f32.gmra.mxu0 %v110
    %v131 = vpop.f32.mrf.mxu0
    %v132 = vadd.f32 0.0, %v131
    %133 = vdwg.mxu0
    %135 = vrot.lane.b32.xlu0 %v99, 96
    %v136 = vpop.permute.xlu0 %135
    %v137 = vsel %vm109, %v99, 0
    %v139 = vsel %vm109, %v136, 0
    %141 = vmatpush.xpose.msra.mxu0 0.0
    %142 = vmatpush.xpose.msra.mxu0 0.0
    %143 = vmatpush.xpose.msra.mxu0 0.0
    %144 = vmatpush.xpose.msra.mxu0 0.0
    %145 = vmatpush.xpose.msra.mxu0 0.0
    %146 = vmatpush.xpose.msra.mxu0 0.0
    %147 = vmatpush.xpose.msra.mxu0 0.0
    %148 = vmatpush.xpose.msra.mxu0 0.0
    %149 = vmatpush.xpose.msra.mxu0 0.0
    %150 = vmatpush.xpose.msra.mxu0 0.0
    %151 = vmatpush.xpose.msra.mxu0 0.0
    %152 = vmatpush.xpose.msra.mxu0 0.0
    %153 = vmatpush.xpose.msra.mxu0 0.0
    %154 = vmatpush.xpose.msra.mxu0 0.0
    %155 = vmatpush.xpose.msra.mxu0 0.0
    %156 = vmatpush.xpose.msra.mxu0 %v139
    %157 = vmatmul.f32.gmra.mxu0 %v137
    %v158 = vpop.f32.mrf.mxu0
    %v159 = vadd.f32 0.0, %v158
    %160 = vdwg.mxu0
    %v161 = vmul.f32 %v132, 0.17677669
    %v162 = vmul.f32 %v159, 0.17677669
    %v163 = vsel %vm105, %v161, -1e+30
    %v164 = vsel %vm105, %v162, -1e+30
    %v165 = vsel %vm109, %v163, -inf
    %166 = vmax.xlane.f32.xlu0 %v165
    %v167 = vpop.xlane.xlu0 %166
    %v168 = vsel %vm109, %v164, -inf
    %169 = vmax.xlane.f32.xlu0 %v168
    %v170 = vpop.xlane.xlu0 %169
    %v171 = vsub.f32 %v163, %v167
    %v172 = vsub.f32 %v164, %v170
    %v173 = vmul.f32 %v171, 1.442695
    %v174 = vpow.pop %v173
    %v175 = vmul.f32 %v172, 1.442695
    %v176 = vpow.pop %v175
    %v177 = vsel %vm109, %v174, 0.0
    %178 = vadd.xlane.f32.xlu0 %v177
    %v179 = vpop.xlane.xlu0 %178
    %v180 = vsel %vm109, %v176, 0.0
    %181 = vadd.xlane.f32.xlu0 %v180
    %v182 = vpop.xlane.xlu0 %181
    %183 = vrot.lane.b32.xlu0 %v96, 64
    %v184 = vpop.permute.xlu0 %183
    %v187 = vsel %vm109, %v174, 0
    %189 = vmatpush.msra.mxu0 0.0
    %190 = vmatpush.msra.mxu0 0.0
    %191 = vmatpush.msra.mxu0 0.0
    %192 = vmatpush.msra.mxu0 0.0
    %193 = vmatpush.msra.mxu0 0.0
    %194 = vmatpush.msra.mxu0 0.0
    %195 = vmatpush.msra.mxu0 0.0
    %196 = vmatpush.msra.mxu0 0.0
    %197 = vmatpush.msra.mxu0 0.0
    %198 = vmatpush.msra.mxu0 0.0
    %199 = vmatpush.msra.mxu0 0.0
    %200 = vmatpush.msra.mxu0 0.0
    %201 = vmatpush.msra.mxu0 0.0
    %202 = vmatpush.msra.mxu0 0.0
    %203 = vmatpush.msra.mxu0 0.0
    %204 = vmatpush.msra.mxu0 %v184
    %205 = vmatmul.f32.gmra.mxu0 %v187
    %v206 = vpop.f32.mrf.mxu0
    %v207 = vadd.f32 0.0, %v206
    %208 = vdwg.mxu0
    %209 = vrot.lane.b32.xlu0 %v99, 64
    %v210 = vpop.permute.xlu0 %209
    %v213 = vsel %vm109, %v176, 0
    %215 = vmatpush.msra.mxu0 0.0
    %216 = vmatpush.msra.mxu0 0.0
    %217 = vmatpush.msra.mxu0 0.0
    %218 = vmatpush.msra.mxu0 0.0
    %219 = vmatpush.msra.mxu0 0.0
    %220 = vmatpush.msra.mxu0 0.0
    %221 = vmatpush.msra.mxu0 0.0
    %222 = vmatpush.msra.mxu0 0.0
    %223 = vmatpush.msra.mxu0 0.0
    %224 = vmatpush.msra.mxu0 0.0
    %225 = vmatpush.msra.mxu0 0.0
    %226 = vmatpush.msra.mxu0 0.0
    %227 = vmatpush.msra.mxu0 0.0
    %228 = vmatpush.msra.mxu0 0.0
    %229 = vmatpush.msra.mxu0 0.0
    %230 = vmatpush.msra.mxu0 %v210
    %231 = vmatmul.f32.gmra.mxu0 %v213
    %v232 = vpop.f32.mrf.mxu0
    %v233 = vadd.f32 0.0, %v232
    %234 = vdwg.mxu0
    %v235 = vrcp.pop %v179
    %v236 = vrcp.pop %v182
    %v237 = vmul.f32 %v207, %v235
    %v238 = vmul.f32 %v233, %v236
    %239 = vst.msk [vmem:[#allocation2] sm:$0xff] %vm109, %v237
    %240 = vst.msk [vmem:[#allocation2 + $0x8] sm:$0xff] %vm109, %v238
    %241 = vrot.lane.b32.xlu0 %v96, 120
    %v242 = vpop.permute.xlu0 %241
    %243 = vrot.lane.b32.xlu0 %v96, 88
    %v244 = vpop.permute.xlu0 %243
    %v245 = vsel %vm109, %v242, 0
    %v247 = vsel %vm109, %v244, 0
    %249 = vmatpush.xpose.msra.mxu0 0.0
    %250 = vmatpush.xpose.msra.mxu0 0.0
    %251 = vmatpush.xpose.msra.mxu0 0.0
    %252 = vmatpush.xpose.msra.mxu0 0.0
    %253 = vmatpush.xpose.msra.mxu0 0.0
    %254 = vmatpush.xpose.msra.mxu0 0.0
    %255 = vmatpush.xpose.msra.mxu0 0.0
    %256 = vmatpush.xpose.msra.mxu0 0.0
    %257 = vmatpush.xpose.msra.mxu0 0.0
    %258 = vmatpush.xpose.msra.mxu0 0.0
    %259 = vmatpush.xpose.msra.mxu0 0.0
    %260 = vmatpush.xpose.msra.mxu0 0.0
    %261 = vmatpush.xpose.msra.mxu0 0.0
    %262 = vmatpush.xpose.msra.mxu0 0.0
    %263 = vmatpush.xpose.msra.mxu0 0.0
    %264 = vmatpush.xpose.msra.mxu0 %v247
    %265 = vmatmul.f32.gmra.mxu0 %v245
    %v266 = vpop.f32.mrf.mxu0
    %v267 = vadd.f32 0.0, %v266
    %268 = vdwg.mxu0
    %269 = vrot.lane.b32.xlu0 %v99, 120
    %v270 = vpop.permute.xlu0 %269
    %271 = vrot.lane.b32.xlu0 %v99, 88
    %v272 = vpop.permute.xlu0 %271
    %v273 = vsel %vm109, %v270, 0
    %v275 = vsel %vm109, %v272, 0
    %277 = vmatpush.xpose.msra.mxu0 0.0
    %278 = vmatpush.xpose.msra.mxu0 0.0
    %279 = vmatpush.xpose.msra.mxu0 0.0
    %280 = vmatpush.xpose.msra.mxu0 0.0
    %281 = vmatpush.xpose.msra.mxu0 0.0
    %282 = vmatpush.xpose.msra.mxu0 0.0
    %283 = vmatpush.xpose.msra.mxu0 0.0
    %284 = vmatpush.xpose.msra.mxu0 0.0
    %285 = vmatpush.xpose.msra.mxu0 0.0
    %286 = vmatpush.xpose.msra.mxu0 0.0
    %287 = vmatpush.xpose.msra.mxu0 0.0
    %288 = vmatpush.xpose.msra.mxu0 0.0
    %289 = vmatpush.xpose.msra.mxu0 0.0
    %290 = vmatpush.xpose.msra.mxu0 0.0
    %291 = vmatpush.xpose.msra.mxu0 0.0
    %292 = vmatpush.xpose.msra.mxu0 %v275
    %293 = vmatmul.f32.gmra.mxu0 %v273
    %v294 = vpop.f32.mrf.mxu0
    %v295 = vadd.f32 0.0, %v294
    %296 = vdwg.mxu0
    %v297 = vmul.f32 %v267, 0.17677669
    %v298 = vmul.f32 %v295, 0.17677669
    %v299 = vsel %vm105, %v297, -1e+30
    %v300 = vsel %vm105, %v298, -1e+30
    %v301 = vsel %vm109, %v299, -inf
    %302 = vmax.xlane.f32.xlu0 %v301
    %v303 = vpop.xlane.xlu0 %302
    %v304 = vsel %vm109, %v300, -inf
    %305 = vmax.xlane.f32.xlu0 %v304
    %v306 = vpop.xlane.xlu0 %305
    %v307 = vsub.f32 %v299, %v303
    %v308 = vsub.f32 %v300, %v306
    %v309 = vmul.f32 %v307, 1.442695
    %v310 = vpow.pop %v309
    %v311 = vmul.f32 %v308, 1.442695
    %v312 = vpow.pop %v311
    %v313 = vsel %vm109, %v310, 0.0
    %314 = vadd.xlane.f32.xlu0 %v313
    %v315 = vpop.xlane.xlu0 %314
    %v316 = vsel %vm109, %v312, 0.0
    %317 = vadd.xlane.f32.xlu0 %v316
    %v318 = vpop.xlane.xlu0 %317
    %319 = vrot.lane.b32.xlu0 %v96, 56
    %v320 = vpop.permute.xlu0 %319
    %v323 = vsel %vm109, %v310, 0
    %325 = vmatpush.msra.mxu0 0.0
    %326 = vmatpush.msra.mxu0 0.0
    %327 = vmatpush.msra.mxu0 0.0
    %328 = vmatpush.msra.mxu0 0.0
    %329 = vmatpush.msra.mxu0 0.0
    %330 = vmatpush.msra.mxu0 0.0
    %331 = vmatpush.msra.mxu0 0.0
    %332 = vmatpush.msra.mxu0 0.0
    %333 = vmatpush.msra.mxu0 0.0
    %334 = vmatpush.msra.mxu0 0.0
    %335 = vmatpush.msra.mxu0 0.0
    %336 = vmatpush.msra.mxu0 0.0
    %337 = vmatpush.msra.mxu0 0.0
    %338 = vmatpush.msra.mxu0 0.0
    %339 = vmatpush.msra.mxu0 0.0
    %340 = vmatpush.msra.mxu0 %v320
    %341 = vmatmul.f32.gmra.mxu0 %v323
    %v342 = vpop.f32.mrf.mxu0
    %v343 = vadd.f32 0.0, %v342
    %344 = vdwg.mxu0
    %345 = vrot.lane.b32.xlu0 %v99, 56
    %v346 = vpop.permute.xlu0 %345
    %v349 = vsel %vm109, %v312, 0
    %351 = vmatpush.msra.mxu0 0.0
    %352 = vmatpush.msra.mxu0 0.0
    %353 = vmatpush.msra.mxu0 0.0
    %354 = vmatpush.msra.mxu0 0.0
    %355 = vmatpush.msra.mxu0 0.0
    %356 = vmatpush.msra.mxu0 0.0
    %357 = vmatpush.msra.mxu0 0.0
    %358 = vmatpush.msra.mxu0 0.0
    %359 = vmatpush.msra.mxu0 0.0
    %360 = vmatpush.msra.mxu0 0.0
    %361 = vmatpush.msra.mxu0 0.0
    %362 = vmatpush.msra.mxu0 0.0
    %363 = vmatpush.msra.mxu0 0.0
    %364 = vmatpush.msra.mxu0 0.0
    %365 = vmatpush.msra.mxu0 0.0
    %366 = vmatpush.msra.mxu0 %v346
    %367 = vmatmul.f32.gmra.mxu0 %v349
    %v368 = vpop.f32.mrf.mxu0
    %v369 = vadd.f32 0.0, %v368
    %370 = vdwg.mxu0
    %v371 = vrcp.pop %v315
    %v372 = vrcp.pop %v318
    %v373 = vmul.f32 %v343, %v371
    %v374 = vmul.f32 %v369, %v372
    %377 = vrot.lane.b32.xlu0 %v373, 8
    %v378 = vpop.permute.xlu0 %377
    %379 = vrot.lane.b32.xlu0 %v374, 8
    %v380 = vpop.permute.xlu0 %379
    %vm383 = vcmask 130112
    %384 = vst.msk [vmem:[#allocation2] sm:$0xff] %vm383, %v378
    %385 = vst.msk [vmem:[#allocation2 + $0x8] sm:$0xff] %vm383, %v380
    %386 = vrot.lane.b32.xlu0 %v96, 112
    %v387 = vpop.permute.xlu0 %386
    %388 = vrot.lane.b32.xlu0 %v96, 80
    %v389 = vpop.permute.xlu0 %388
    %v390 = vsel %vm109, %v387, 0
    %v392 = vsel %vm109, %v389, 0
    %394 = vmatpush.xpose.msra.mxu0 0.0
    %395 = vmatpush.xpose.msra.mxu0 0.0
    %396 = vmatpush.xpose.msra.mxu0 0.0
    %397 = vmatpush.xpose.msra.mxu0 0.0
    %398 = vmatpush.xpose.msra.mxu0 0.0
    %399 = vmatpush.xpose.msra.mxu0 0.0
    %400 = vmatpush.xpose.msra.mxu0 0.0
    %401 = vmatpush.xpose.msra.mxu0 0.0
    %402 = vmatpush.xpose.msra.mxu0 0.0
    %403 = vmatpush.xpose.msra.mxu0 0.0
    %404 = vmatpush.xpose.msra.mxu0 0.0
    %405 = vmatpush.xpose.msra.mxu0 0.0
    %406 = vmatpush.xpose.msra.mxu0 0.0
    %407 = vmatpush.xpose.msra.mxu0 0.0
    %408 = vmatpush.xpose.msra.mxu0 0.0
    %409 = vmatpush.xpose.msra.mxu0 %v392
    %410 = vmatmul.f32.gmra.mxu0 %v390
    %v411 = vpop.f32.mrf.mxu0
    %v412 = vadd.f32 0.0, %v411
    %413 = vdwg.mxu0
    %414 = vrot.lane.b32.xlu0 %v99, 112
    %v415 = vpop.permute.xlu0 %414
    %416 = vrot.lane.b32.xlu0 %v99, 80
    %v417 = vpop.permute.xlu0 %416
    %v418 = vsel %vm109, %v415, 0
    %v420 = vsel %vm109, %v417, 0
    %422 = vmatpush.xpose.msra.mxu0 0.0
    %423 = vmatpush.xpose.msra.mxu0 0.0
    %424 = vmatpush.xpose.msra.mxu0 0.0
    %425 = vmatpush.xpose.msra.mxu0 0.0
    %426 = vmatpush.xpose.msra.mxu0 0.0
    %427 = vmatpush.xpose.msra.mxu0 0.0
    %428 = vmatpush.xpose.msra.mxu0 0.0
    %429 = vmatpush.xpose.msra.mxu0 0.0
    %430 = vmatpush.xpose.msra.mxu0 0.0
    %431 = vmatpush.xpose.msra.mxu0 0.0
    %432 = vmatpush.xpose.msra.mxu0 0.0
    %433 = vmatpush.xpose.msra.mxu0 0.0
    %434 = vmatpush.xpose.msra.mxu0 0.0
    %435 = vmatpush.xpose.msra.mxu0 0.0
    %436 = vmatpush.xpose.msra.mxu0 0.0
    %437 = vmatpush.xpose.msra.mxu0 %v420
    %438 = vmatmul.f32.gmra.mxu0 %v418
    %v439 = vpop.f32.mrf.mxu0
    %v440 = vadd.f32 0.0, %v439
    %441 = vdwg.mxu0
    %v442 = vmul.f32 %v412, 0.17677669
    %v443 = vmul.f32 %v440, 0.17677669
    %v444 = vsel %vm105, %v442, -1e+30
    %v445 = vsel %vm105, %v443, -1e+30
    %v446 = vsel %vm109, %v444, -inf
    %447 = vmax.xlane.f32.xlu0 %v446
    %v448 = vpop.xlane.xlu0 %447
    %v449 = vsel %vm109, %v445, -inf
    %450 = vmax.xlane.f32.xlu0 %v449
    %v451 = vpop.xlane.xlu0 %450
    %v452 = vsub.f32 %v444, %v448
    %v453 = vsub.f32 %v445, %v451
    %v454 = vmul.f32 %v452, 1.442695
    %v455 = vpow.pop %v454
    %v456 = vmul.f32 %v453, 1.442695
    %v457 = vpow.pop %v456
    %v458 = vsel %vm109, %v455, 0.0
    %459 = vadd.xlane.f32.xlu0 %v458
    %v460 = vpop.xlane.xlu0 %459
    %v461 = vsel %vm109, %v457, 0.0
    %462 = vadd.xlane.f32.xlu0 %v461
    %v463 = vpop.xlane.xlu0 %462
    %464 = vrot.lane.b32.xlu0 %v96, 48
    %v465 = vpop.permute.xlu0 %464
    %v468 = vsel %vm109, %v455, 0
    %470 = vmatpush.msra.mxu0 0.0
    %471 = vmatpush.msra.mxu0 0.0
    %472 = vmatpush.msra.mxu0 0.0
    %473 = vmatpush.msra.mxu0 0.0
    %474 = vmatpush.msra.mxu0 0.0
    %475 = vmatpush.msra.mxu0 0.0
    %476 = vmatpush.msra.mxu0 0.0
    %477 = vmatpush.msra.mxu0 0.0
    %478 = vmatpush.msra.mxu0 0.0
    %479 = vmatpush.msra.mxu0 0.0
    %480 = vmatpush.msra.mxu0 0.0
    %481 = vmatpush.msra.mxu0 0.0
    %482 = vmatpush.msra.mxu0 0.0
    %483 = vmatpush.msra.mxu0 0.0
    %484 = vmatpush.msra.mxu0 0.0
    %485 = vmatpush.msra.mxu0 %v465
    %486 = vmatmul.f32.gmra.mxu0 %v468
    %v487 = vpop.f32.mrf.mxu0
    %v488 = vadd.f32 0.0, %v487
    %489 = vdwg.mxu0
    %490 = vrot.lane.b32.xlu0 %v99, 48
    %v491 = vpop.permute.xlu0 %490
    %v494 = vsel %vm109, %v457, 0
    %496 = vmatpush.msra.mxu0 0.0
    %497 = vmatpush.msra.mxu0 0.0
    %498 = vmatpush.msra.mxu0 0.0
    %499 = vmatpush.msra.mxu0 0.0
    %500 = vmatpush.msra.mxu0 0.0
    %501 = vmatpush.msra.mxu0 0.0
    %502 = vmatpush.msra.mxu0 0.0
    %503 = vmatpush.msra.mxu0 0.0
    %504 = vmatpush.msra.mxu0 0.0
    %505 = vmatpush.msra.mxu0 0.0
    %506 = vmatpush.msra.mxu0 0.0
    %507 = vmatpush.msra.mxu0 0.0
    %508 = vmatpush.msra.mxu0 0.0
    %509 = vmatpush.msra.mxu0 0.0
    %510 = vmatpush.msra.mxu0 0.0
    %511 = vmatpush.msra.mxu0 %v491
    %512 = vmatmul.f32.gmra.mxu0 %v494
    %v513 = vpop.f32.mrf.mxu0
    %v514 = vadd.f32 0.0, %v513
    %515 = vdwg.mxu0
    %v516 = vrcp.pop %v460
    %v517 = vrcp.pop %v463
    %v518 = vmul.f32 %v488, %v516
    %v519 = vmul.f32 %v514, %v517
    %522 = vrot.lane.b32.xlu0 %v518, 16
    %v523 = vpop.permute.xlu0 %522
    %524 = vrot.lane.b32.xlu0 %v519, 16
    %v525 = vpop.permute.xlu0 %524
    %vm528 = vcmask 195712
    %529 = vst.msk [vmem:[#allocation2] sm:$0xff] %vm528, %v523
    %530 = vst.msk [vmem:[#allocation2 + $0x8] sm:$0xff] %vm528, %v525
    %531 = vrot.lane.b32.xlu0 %v96, 104
    %v532 = vpop.permute.xlu0 %531
    %533 = vrot.lane.b32.xlu0 %v96, 72
    %v534 = vpop.permute.xlu0 %533
    %v535 = vsel %vm109, %v532, 0
    %v537 = vsel %vm109, %v534, 0
    %539 = vmatpush.xpose.msra.mxu0 0.0
    %540 = vmatpush.xpose.msra.mxu0 0.0
    %541 = vmatpush.xpose.msra.mxu0 0.0
    %542 = vmatpush.xpose.msra.mxu0 0.0
    %543 = vmatpush.xpose.msra.mxu0 0.0
    %544 = vmatpush.xpose.msra.mxu0 0.0
    %545 = vmatpush.xpose.msra.mxu0 0.0
    %546 = vmatpush.xpose.msra.mxu0 0.0
    %547 = vmatpush.xpose.msra.mxu0 0.0
    %548 = vmatpush.xpose.msra.mxu0 0.0
    %549 = vmatpush.xpose.msra.mxu0 0.0
    %550 = vmatpush.xpose.msra.mxu0 0.0
    %551 = vmatpush.xpose.msra.mxu0 0.0
    %552 = vmatpush.xpose.msra.mxu0 0.0
    %553 = vmatpush.xpose.msra.mxu0 0.0
    %554 = vmatpush.xpose.msra.mxu0 %v537
    %555 = vmatmul.f32.gmra.mxu0 %v535
    %v556 = vpop.f32.mrf.mxu0
    %v557 = vadd.f32 0.0, %v556
    %558 = vdwg.mxu0
    %559 = vrot.lane.b32.xlu0 %v99, 104
    %v560 = vpop.permute.xlu0 %559
    %561 = vrot.lane.b32.xlu0 %v99, 72
    %v562 = vpop.permute.xlu0 %561
    %v563 = vsel %vm109, %v560, 0
    %v565 = vsel %vm109, %v562, 0
    %567 = vmatpush.xpose.msra.mxu0 0.0
    %568 = vmatpush.xpose.msra.mxu0 0.0
    %569 = vmatpush.xpose.msra.mxu0 0.0
    %570 = vmatpush.xpose.msra.mxu0 0.0
    %571 = vmatpush.xpose.msra.mxu0 0.0
    %572 = vmatpush.xpose.msra.mxu0 0.0
    %573 = vmatpush.xpose.msra.mxu0 0.0
    %574 = vmatpush.xpose.msra.mxu0 0.0
    %575 = vmatpush.xpose.msra.mxu0 0.0
    %576 = vmatpush.xpose.msra.mxu0 0.0
    %577 = vmatpush.xpose.msra.mxu0 0.0
    %578 = vmatpush.xpose.msra.mxu0 0.0
    %579 = vmatpush.xpose.msra.mxu0 0.0
    %580 = vmatpush.xpose.msra.mxu0 0.0
    %581 = vmatpush.xpose.msra.mxu0 0.0
    %582 = vmatpush.xpose.msra.mxu0 %v565
    %583 = vmatmul.f32.gmra.mxu0 %v563
    %v584 = vpop.f32.mrf.mxu0
    %v585 = vadd.f32 0.0, %v584
    %586 = vdwg.mxu0
    %v587 = vmul.f32 %v557, 0.17677669
    %v588 = vmul.f32 %v585, 0.17677669
    %v589 = vsel %vm105, %v587, -1e+30
    %v590 = vsel %vm105, %v588, -1e+30
    %v591 = vsel %vm109, %v589, -inf
    %592 = vmax.xlane.f32.xlu0 %v591
    %v593 = vpop.xlane.xlu0 %592
    %v594 = vsel %vm109, %v590, -inf
    %595 = vmax.xlane.f32.xlu0 %v594
    %v596 = vpop.xlane.xlu0 %595
    %v597 = vsub.f32 %v589, %v593
    %v598 = vsub.f32 %v590, %v596
    %v599 = vmul.f32 %v597, 1.442695
    %v600 = vpow.pop %v599
    %v601 = vmul.f32 %v598, 1.442695
    %v602 = vpow.pop %v601
    %v603 = vsel %vm109, %v600, 0.0
    %604 = vadd.xlane.f32.xlu0 %v603
    %v605 = vpop.xlane.xlu0 %604
    %v606 = vsel %vm109, %v602, 0.0
    %607 = vadd.xlane.f32.xlu0 %v606
    %v608 = vpop.xlane.xlu0 %607
    %609 = vrot.lane.b32.xlu0 %v96, 40
    %v610 = vpop.permute.xlu0 %609
    %v613 = vsel %vm109, %v600, 0
    %615 = vmatpush.msra.mxu0 0.0
    %616 = vmatpush.msra.mxu0 0.0
    %617 = vmatpush.msra.mxu0 0.0
    %618 = vmatpush.msra.mxu0 0.0
    %619 = vmatpush.msra.mxu0 0.0
    %620 = vmatpush.msra.mxu0 0.0
    %621 = vmatpush.msra.mxu0 0.0
    %622 = vmatpush.msra.mxu0 0.0
    %623 = vmatpush.msra.mxu0 0.0
    %624 = vmatpush.msra.mxu0 0.0
    %625 = vmatpush.msra.mxu0 0.0
    %626 = vmatpush.msra.mxu0 0.0
    %627 = vmatpush.msra.mxu0 0.0
    %628 = vmatpush.msra.mxu0 0.0
    %629 = vmatpush.msra.mxu0 0.0
    %630 = vmatpush.msra.mxu0 %v610
    %631 = vmatmul.f32.gmra.mxu0 %v613
    %v632 = vpop.f32.mrf.mxu0
    %v633 = vadd.f32 0.0, %v632
    %634 = vdwg.mxu0
    %635 = vrot.lane.b32.xlu0 %v99, 40
    %v636 = vpop.permute.xlu0 %635
    %v639 = vsel %vm109, %v602, 0
    %641 = vmatpush.msra.mxu0 0.0
    %642 = vmatpush.msra.mxu0 0.0
    %643 = vmatpush.msra.mxu0 0.0
    %644 = vmatpush.msra.mxu0 0.0
    %645 = vmatpush.msra.mxu0 0.0
    %646 = vmatpush.msra.mxu0 0.0
    %647 = vmatpush.msra.mxu0 0.0
    %648 = vmatpush.msra.mxu0 0.0
    %649 = vmatpush.msra.mxu0 0.0
    %650 = vmatpush.msra.mxu0 0.0
    %651 = vmatpush.msra.mxu0 0.0
    %652 = vmatpush.msra.mxu0 0.0
    %653 = vmatpush.msra.mxu0 0.0
    %654 = vmatpush.msra.mxu0 0.0
    %655 = vmatpush.msra.mxu0 0.0
    %656 = vmatpush.msra.mxu0 %v636
    %657 = vmatmul.f32.gmra.mxu0 %v639
    %v658 = vpop.f32.mrf.mxu0
    %v659 = vadd.f32 0.0, %v658
    %660 = vdwg.mxu0
    %v661 = vrcp.pop %v605
    %v662 = vrcp.pop %v608
    %v663 = vmul.f32 %v633, %v661
    %v664 = vmul.f32 %v659, %v662
    %667 = vrot.lane.b32.xlu0 %v663, 24
    %v668 = vpop.permute.xlu0 %667
    %669 = vrot.lane.b32.xlu0 %v664, 24
    %v670 = vpop.permute.xlu0 %669
    %vm673 = vcmask 261312
    %674 = vst.msk [vmem:[#allocation2] sm:$0xff] %vm673, %v668
    %675 = vst.msk [vmem:[#allocation2 + $0x8] sm:$0xff] %vm673, %v670
    %v676 = vld [vmem:[#allocation2] sm:$0xff]
    %v677 = vld [vmem:[#allocation2 + $0x8] sm:$0xff]
    %v678 = vld [vmem:[#allocation8] sm:$0xff]
    %v679 = vld [vmem:[#allocation8 + $0x8] sm:$0xff]
    %v680 = vld [vmem:[#allocation8 + $0x10] sm:$0xff]
    %v681 = vld [vmem:[#allocation8 + $0x18] sm:$0xff]
    %v682 = vld [vmem:[%s3] sm:$0x1]
    %v684 = vperm.slane %v682, 0
    %v687 = vsel %vm71, %v676, 0
    %v690 = vsel %vm71, %v677, 0
    %692 = vmatpush.msra.mxu0 0.0
    %693 = vmatpush.msra.mxu0 0.0
    %694 = vmatpush.msra.mxu0 0.0
    %695 = vmatpush.msra.mxu0 0.0
    %696 = vmatpush.msra.mxu0 0.0
    %697 = vmatpush.msra.mxu0 0.0
    %698 = vmatpush.msra.mxu0 0.0
    %699 = vmatpush.msra.mxu0 0.0
    %700 = vmatpush.msra.mxu0 0.0
    %701 = vmatpush.msra.mxu0 0.0
    %702 = vmatpush.msra.mxu0 0.0
    %703 = vmatpush.msra.mxu0 0.0
    %704 = vmatpush.msra.mxu0 %v681
    %705 = vmatpush.msra.mxu0 %v680
    %706 = vmatpush.msra.mxu0 %v679
    %707 = vmatpush.msra.mxu0 %v678
    %708 = vmatmul.f32.gmra.mxu0 %v687
    %v709 = vpop.f32.mrf.mxu0
    %v710 = vadd.f32 %v684, %v709
    %711 = vmatmul.f32.gmra.mxu0 %v690
    %v712 = vpop.f32.mrf.mxu0
    %v713 = vadd.f32 %v684, %v712
    %714 = vdwg.mxu0
    %715 = vst.msk [vmem:[#allocation9] sm:$0xff] %vm71, %v710
    %716 = vst.msk [vmem:[#allocation9 + $0x8] sm:$0xff] %vm71, %v713
    // Predicated region
    $region30: #{tpu_custom_call.1} parent=1 // pred_check
      _
    $region31: #{tpu_custom_call.1} parent=1 // pred_check_branch
      %718 = sbr.rel (0) target = $region33
    $region32: #{tpu_custom_call.1} parent=1 // pred_region
      %720 = vsyncadd [#allocation5], 0
      %s721 = sshll.u32 [#allocation9], 4
      %s722 = int_to_ptr.vmem [resolvable:$true] %s721
      %s723 = sshll.u32 %s4, 4
      %s724 = int_to_ptr.hbm [resolvable:$true] %s723
      %729 = dma.vmem_to_hbm [thread:$0]  %s722, 256, %s724, [#allocation5], 128, 128, 8
    $region33: #{tpu_custom_call.1} parent=1 // pred_fallthru
      _
    // Predicated region
    $region34: #{tpu_custom_call.1} parent=1 // pred_check
      _
    $region35: #{tpu_custom_call.1} parent=1 // pred_check_branch
      %731 = sbr.rel (0) target = $region37
    $region36: #{tpu_custom_call.1} parent=1 // pred_region
      %733 = dma.done [#allocation5], 256
    $region37: #{tpu_custom_call.1} parent=1 // pred_fallthru
      _
    %734 = vsyncpa [#allocation4], 1
    %735 = vsyncpa [#allocation7], 1
    %736 = vsyncpa [#allocation5], 1

</llo_original>
